<compile_context>
chip_gen: v7x
topology: tpu7x:2x2x1
jax: 0.10.0
libtpu: 0.0.40
codegen_flags: <defaults>
</compile_context>

<pallas_src>
import functools
import math

import jax
import jax.numpy as jnp
from jax.experimental import pallas as pl
from jax.experimental.pallas import tpu as pltpu


def _round_up(v, m):
    return (v + m - 1) // m * m


def _cdiv(a, b):
    return (a + b - 1) // b


# ----------------------------- Pallas kernel --------------------------------

def _linear_kernel(x_ref, w_ref, b_ref, o_ref, *, activation):
    """o = act(x @ w + b) for one (TM, K) row tile.

    x_ref : (TM, K)  activation row tile (cast to bf16 for the MXU)
    w_ref : (K, N)   weight, bf16, VMEM-resident across grid steps
    b_ref : (1, N)   bias, f32, resident (broadcasts over rows)
    o_ref : (TM, N)  N is a multiple of 128 -> unmasked lane-dense stores
    """
    a = x_ref[...].astype(jnp.bfloat16)
    acc = jnp.dot(a, w_ref[...], preferred_element_type=jnp.float32)
    acc = acc + b_ref[...]
    if activation is not None:
        acc = activation(acc)
    o_ref[...] = acc.astype(o_ref.dtype)


# ------------------------------ Wrappers -------------------------------------

_VMEM_SOFT_BUDGET = 44 * 1024 * 1024   # headroom under v7x's 64 MiB VMEM


def _pallas_linear(x, w, b, *, activation=None, keep_padded=False,
                   block_rows=1024):
    """y = activation(x @ w + b).

    x : (M, K)  -- K may exceed w.shape[0]; the extra columns multiply
                   zero-padded weight rows (used to chain lane-padded
                   intermediates without a slice copy).
    w : (K0, N), b : (N,)
    Returns (M, N), or (M, round_up(N, 128)) when keep_padded=True (the extra
    columns are the image of zero weight columns / zero bias).
    """
    M, K = x.shape
    K0, N = w.shape
    out_dtype = x.dtype

    # Absorb lane-padding carried in from a previous kernel.
    if K > K0:
        w = jnp.pad(w, ((0, K - K0), (0, 0)))

    # Lane-dense output: pad N to a multiple of 128 (zero cols / zero bias).
    Np = _round_up(N, 128)
    if Np != N:
        w = jnp.pad(w, ((0, 0), (0, Np - N)))
        b = jnp.pad(b, (0, Np - N))

    w = w.astype(jnp.bfloat16)                  # resident, tiny; feeds MXU bf16
    b = b.astype(jnp.float32).reshape(1, Np)    # bias add stays f32

    # Row tile: as large as possible (amortize ~0.35us/step), multiple of 8,
    # and at least 2 grid steps so both v7x TensorCores get work.
    TM = min(block_rows, max(8, _round_up(_cdiv(M, 2), 8)))

    def vmem_need(tm):
        return (2 * tm * K * jnp.dtype(x.dtype).itemsize        # x tile (dbl buf)
                + 2 * tm * Np * jnp.dtype(out_dtype).itemsize   # out tile
                + 2 * K * Np * 2                                # weight (bf16)
                + 2 * Np * 4)                                   # bias

    while TM > 8 and vmem_need(TM) > _VMEM_SOFT_BUDGET:
        TM = max(8, _round_up(TM // 2, 8))

    grid = (_cdiv(M, TM),)   # ragged last block: Pallas masks out-of-bounds stores

    flops = 2 * M * K * Np
    bytes_accessed = (M * K * jnp.dtype(x.dtype).itemsize
                      + K * Np * 2 + Np * 4
                      + M * Np * jnp.dtype(out_dtype).itemsize)
    transcendentals = M * Np if activation is not None else 0
    vmem_limit = min(60 * 1024 * 1024,
                     max(32 * 1024 * 1024, vmem_need(TM) + (1 << 20)))

    out = pl.pallas_call(
        functools.partial(_linear_kernel, activation=activation),
        out_shape=jax.ShapeDtypeStruct((M, Np), out_dtype),
        grid_spec=pltpu.PrefetchScalarGridSpec(
            num_scalar_prefetch=0,
            grid=grid,
            in_specs=[
                pl.BlockSpec((TM, K), lambda i: (i, 0)),   # streaming row tile
                pl.BlockSpec((K, Np), lambda i: (0, 0)),   # weight (resident)
                pl.BlockSpec((1, Np), lambda i: (0, 0)),   # bias (resident)
            ],
            out_specs=pl.BlockSpec((TM, Np), lambda i: (i, 0)),
        ),
        compiler_params=pltpu.CompilerParams(
            dimension_semantics=("parallel",),
            vmem_limit_bytes=int(vmem_limit),
        ),
        cost_estimate=pl.CostEstimate(
            flops=flops,
            bytes_accessed=bytes_accessed,
            transcendentals=transcendentals),
    )(x, w, b)

    if keep_padded or Np == N:
        return out
    return out[:, :N]


def project_in_out_forward(x, params, fn=None, *, fn_is_elementwise=False,
                           block_rows=1024):
    """ProjectInOut forward:  project_out(fn(project_in(x))).

    x      : (B, S, dim_in)
    params : {'w_in': (dim_in, dim_out), 'b_in': (dim_out,),
              'w_out': (dim_out, dim_in), 'b_out': (dim_in,)}
             or {} when dim_in == dim_out (nn.Identity projections).
             (PyTorch stores nn.Linear weight as (out, in); here it is kept
              pre-transposed as (in, out) -- same math: x @ W.T + b.)
    fn     : wrapped sub-module as a JAX callable.  If it is a pure
             elementwise map, set fn_is_elementwise=True and it is fused into
             the project_in kernel epilogue (saves one HBM round trip of the
             (M, dim_out) intermediate).
    """
    if fn is None:
        fn = lambda t: t

    B, S, D_in = x.shape
    need_projection = "w_in" in params

    if not need_projection:
        # Both projections are nn.Identity.
        return fn(x)

    w_in, b_in = params["w_in"], params["b_in"]
    w_out, b_out = params["w_out"], params["b_out"]
    D_out = w_in.shape[1]
    M = B * S
    x2d = x.reshape(M, D_in)

    if fn_is_elementwise:
        # fn fused into project_in's epilogue; the intermediate stays
        # lane-padded and is consumed directly by project_out (zero-padded
        # weight rows absorb the padding -> no slice copy).
        h2d = _pallas_linear(x2d, w_in, b_in, activation=fn,
                             keep_padded=True, block_rows=block_rows)
    else:
        # TODO(synk): `fn` is an arbitrary wrapped module (a cross-attention
        # Transformer in CrossViT); it has no single Pallas equivalent and is
        # applied as a plain JAX callable between the two projection kernels.
        h = _pallas_linear(x2d, w_in, b_in,
                           block_rows=block_rows).reshape(B, S, D_out)
        h2d = fn(h).reshape(M, -1)

    y2d = _pallas_linear(h2d, w_out, b_out, block_rows=block_rows)
    return y2d.reshape(B, S, D_in)


# --------------------------- References (pure JAX) ----------------------------

def _reference_f32(x, params, fn):
    h = x @ params["w_in"] + params["b_in"]
    h = fn(h)
    return h @ params["w_out"] + params["b_out"]


def _reference_bf16(x, params, fn):
    """Mirrors the kernel's bf16-input / f32-accumulate math."""
    def lin(a, w, b):
        return jnp.dot(a.astype(jnp.bfloat16), w.astype(jnp.bfloat16),
                       preferred_element_type=jnp.float32) + b.astype(jnp.float32)
    h = fn(lin(x, params["w_in"], params["b_in"]))
    return lin(h, params["w_out"], params["b_out"])


# --------------------------------- Main ---------------------------------------

if __name__ == "__main__":
    # Small config: batch=2, seq=8, dim_in=32, dim_out=64.
    B, S = 2, 8
    dim_in, dim_out = 32, 64

    key = jax.random.PRNGKey(0)
    k = jax.random.split(key, 5)
    x = jax.random.normal(k[0], (B, S, dim_in), jnp.float32)

    bound_in = 1.0 / math.sqrt(dim_in)
    bound_out = 1.0 / math.sqrt(dim_out)
    params = {
        "w_in":  jax.random.uniform(k[1], (dim_in, dim_out), jnp.float32,
                                    -bound_in, bound_in),
        "b_in":  jax.random.uniform(k[2], (dim_out,), jnp.float32,
                                    -bound_in, bound_in),
        "w_out": jax.random.uniform(k[3], (dim_out, dim_in), jnp.float32,
                                    -bound_out, bound_out),
        "b_out": jax.random.uniform(k[4], (dim_in,), jnp.float32,
                                    -bound_out, bound_out),
    }

    # Deterministic elementwise stand-in for the wrapped module `fn`.
    fn = jax.nn.gelu

    # Fused-elementwise path (fn applied inside the project_in kernel epilogue).
    out = project_in_out_forward(x, params, fn, fn_is_elementwise=True)
    out = jax.block_until_ready(out)
    assert out.shape == (B, S, dim_in), out.shape

    ref_bf16 = _reference_bf16(x, params, fn)
    ref_f32 = _reference_f32(x, params, fn)
    err_bf16 = float(jnp.max(jnp.abs(out - ref_bf16)))
    err_f32 = float(jnp.max(jnp.abs(out - ref_f32)))
    # Tight check against the bf16-matched reference, loose sanity vs full f32.
    assert jnp.allclose(out, ref_bf16, atol=2e-3, rtol=2e-3), err_bf16
    assert err_f32 < 1e-1, err_f32

    # Generic (non-fused) path must agree with the fused one.
    out_generic = project_in_out_forward(x, params, fn, fn_is_elementwise=False)
    out_generic = jax.block_until_ready(out_generic)
    assert jnp.allclose(out, out_generic, atol=1e-5, rtol=1e-5)

    # Identity path (dim_in == dim_out -> both projections are nn.Identity).
    out_id = project_in_out_forward(x, {}, fn)
    out_id = jax.block_until_ready(out_id)
    assert jnp.allclose(out_id, fn(x), atol=1e-6)

    print("KERNEL_OK")
</pallas_src>

<mosaic_0001>
module attributes {stable_mosaic.version = 11 : i64} {
  func.func @_linear_kernel(%arg0: i32, %arg1: memref<8x32xf32, #tpu.memory_space<vmem>>, %arg2: memref<32x128xbf16, #tpu.memory_space<vmem>>, %arg3: memref<1x128xf32, #tpu.memory_space<vmem>>, %arg4: memref<8x128xf32, #tpu.memory_space<vmem>>) attributes {dimension_semantics = [#tpu.dimension_semantics<parallel>], iteration_bounds = array<i64: 2>, scalar_prefetch = 0 : i64, scratch_operands = 0 : i64, tpu.core_type = #tpu.core_type<tc>, window_params = [{transform_indices = @transform_0, window_bounds = array<i64: 8, 32>}, {pipeline_mode = #tpu.pipeline_mode<synchronous>, transform_indices = @transform_1, window_bounds = array<i64: 32, 128>}, {pipeline_mode = #tpu.pipeline_mode<synchronous>, transform_indices = @transform_2, window_bounds = array<i64: 1, 128>}, {transform_indices = @transform_3, window_bounds = array<i64: 8, 128>}]} {
    %c0 = arith.constant 0 : index
    %c0_0 = arith.constant 0 : index
    %0 = vector.load %arg1[%c0, %c0_0] : memref<8x32xf32, #tpu.memory_space<vmem>>, vector<8x32xf32>
    %1 = arith.truncf %0 : vector<8x32xf32> to vector<8x32xbf16>
    %c0_1 = arith.constant 0 : index
    %c0_2 = arith.constant 0 : index
    %2 = vector.load %arg2[%c0_1, %c0_2] : memref<32x128xbf16, #tpu.memory_space<vmem>>, vector<32x128xbf16>
    %cst = arith.constant dense<0.000000e+00> : vector<8x128xf32>
    %3 = tpu.matmul %1, %2, %cst {dimension_numbers = #tpu.dot_dimension_numbers<[1], [0], [0], [1], [0, 0, 1, 1], [], []>} : vector<8x32xbf16>, vector<32x128xbf16>, vector<8x128xf32> -> vector<8x128xf32>
    %c0_3 = arith.constant 0 : index
    %c0_4 = arith.constant 0 : index
    %4 = vector.load %arg3[%c0_3, %c0_4] : memref<1x128xf32, #tpu.memory_space<vmem>>, vector<1x128xf32>
    %5 = vector.broadcast %4 : vector<1x128xf32> to vector<8x128xf32>
    %6 = arith.addf %3, %5 : vector<8x128xf32>
    %7 = arith.mulf %6, %6 : vector<8x128xf32>
    %8 = arith.mulf %6, %7 : vector<8x128xf32>
    %cst_5 = arith.constant 4.471500e-02 : f32
    %9 = vector.broadcast %cst_5 : f32 to vector<8x128xf32>
    %10 = arith.mulf %9, %8 : vector<8x128xf32>
    %11 = arith.addf %6, %10 : vector<8x128xf32>
    %cst_6 = arith.constant 0.797884583 : f32
    %12 = vector.broadcast %cst_6 : f32 to vector<8x128xf32>
    %13 = arith.mulf %12, %11 : vector<8x128xf32>
    %14 = math.tanh %13 : vector<8x128xf32>
    %cst_7 = arith.constant 1.000000e+00 : f32
    %15 = vector.broadcast %cst_7 : f32 to vector<8x128xf32>
    %16 = arith.addf %15, %14 : vector<8x128xf32>
    %cst_8 = arith.constant 5.000000e-01 : f32
    %17 = vector.broadcast %cst_8 : f32 to vector<8x128xf32>
    %18 = arith.mulf %17, %16 : vector<8x128xf32>
    %19 = arith.mulf %6, %18 : vector<8x128xf32>
    %c0_9 = arith.constant 0 : index
    %c0_10 = arith.constant 0 : index
    %20 = vector.load %arg4[%c0_9, %c0_10] : memref<8x128xf32, #tpu.memory_space<vmem>>, vector<8x128xf32>
    tpu.vector_store %arg4[%c0_9, %c0_10], %19 {strides = array<i32>} : memref<8x128xf32, #tpu.memory_space<vmem>>, vector<8x128xf32>,
    return
  }
  func.func @transform_0(%arg0: i32) -> (i32, i32) {
    %c0_i32 = arith.constant 0 : i32
    %c0_i32_0 = arith.constant 0 : i32
    return %arg0, %c0_i32 : i32, i32
  }
  func.func @transform_1(%arg0: i32) -> (i32, i32) {
    %c0_i32 = arith.constant 0 : i32
    %c0_i32_0 = arith.constant 0 : i32
    %c0_i32_1 = arith.constant 0 : i32
    return %c0_i32, %c0_i32_0 : i32, i32
  }
  func.func @transform_2(%arg0: i32) -> (i32, i32) {
    %c0_i32 = arith.constant 0 : i32
    %c0_i32_0 = arith.constant 0 : i32
    %c0_i32_1 = arith.constant 0 : i32
    return %c0_i32, %c0_i32_0 : i32, i32
  }
  func.func @transform_3(%arg0: i32) -> (i32, i32) {
    %c0_i32 = arith.constant 0 : i32
    %c0_i32_0 = arith.constant 0 : i32
    return %arg0, %c0_i32 : i32, i32
  }
}

</mosaic_0001>

<llo_original>
// kernel: tpu_custom_call.1
$region0: #{tpu_custom_call.1}
  #allocation0 [shape = 'u32[]', space=smem, size = 0x4, offset = 0x4, fixed_abs, tag = 'smem constant byte address 0x4 - core index']
  #allocation1 [shape = 'u32[144,128]{1,0:T(1,128)}', space=vmem, size = 0x12000, scoped, tag = 'internal scratch']
  %s0 = inlined_call_operand.hbm [shape: f32[16,32], index: 0, kind: input, shape index: {}]
  %s1 = inlined_call_operand.hbm [shape: bf16[32,128], index: 1, kind: input, shape index: {}]
  %s2 = inlined_call_operand.vmem [shape: f32[1,128], index: 2, kind: input, shape index: {}]
  %s3 = inlined_call_operand.hbm [shape: f32[16,128], index: 3, kind: output, shape index: {}]
  %s4 = sld [smem:[#allocation0]]
  $region53: #{tpu_custom_call.1} parent=0
    _
  %s6 = ssub.s32 1, %s4
  %s7 = scalar_select 0, %s6, %s4
  $region1: #{tpu_custom_call.1} parent=0
    #allocation2 [shape = 'u8[8192]{0}', space=vmem, size = 0x2000, scoped, tag = 'input window, operand 0']
    #allocation3 [shape = 's32[2]{0}', space=sflag, size = 0x8, scoped, tag = 'scoped memory for tpu_custom_call.1']
    #allocation4 [shape = 's32[2]{0}', space=sflag, size = 0x8, scoped, tag = 'scoped memory for tpu_custom_call.1']
    #allocation5 [shape = 'u8[8192]{0}', space=vmem, size = 0x2000, scoped, tag = 'input window, operand 1, single buffered']
    #allocation6 [shape = 's32[1]{0}', space=sflag, size = 0x4, scoped, tag = 'scoped memory for tpu_custom_call.1']
    #allocation7 [shape = 'u8[8192]{0}', space=vmem, size = 0x2000, scoped, tag = 'output window, operand 0']
    %8 = vsyncpa [#allocation3], 0
    %s9 = scalar_lea.sflag [#allocation3], 1
    %10 = vsyncpa %s9, 0
    %11 = vsyncpa [#allocation6], 0
    %12 = vsyncpa [#allocation4], 0
    %s13 = scalar_lea.sflag [#allocation4], 1
    %14 = vsyncpa %s13, 0
    loop: start=0, step=1, limit=4
    $region2: #{tpu_custom_call.1} parent=1 // loop_pre_header
      _
    $region3: #{tpu_custom_call.1} parent=1 // loop_header
      %s16 = sphi 0, %s20
      %p17 = scmp.ge.s32.totalorder %s16, 4
      %s26 = sphi 0, %s28
      %s29 = sphi 0, %s26
      %s30 = sphi 0, %s29
      %s46 = sphi 0, %s30
      %s50 = sphi 0, %s50
      %s52 = sphi 0, %s50
      %s53 = sphi 0, %s52
      %s67 = sphi 0, %s53
      %s71 = sphi 0, %s71
      %s73 = sphi 0, %s71
      %s74 = sphi 0, %s73
      %s88 = sphi 0, %s74
      %s94 = sphi 0, %s96
      %s97 = sphi 0, %s94
      %s98 = sphi 0, %s97
      %s114 = sphi 0, %s98
    $region4: #{tpu_custom_call.1} parent=1 // loop_header_branch
      %19 = sbr.rel (%p17) target = $region8
    $region5: #{tpu_custom_call.1} parent=1 // loop_body
      %s21 = ssub.s32 %s16, 1
      %s22 = ssub.s32 %s16, 2
      %s23 = sadd.s32 %s16, 1
      %s24 = ssub.s32 %s16, %s23
      %p25 = scmp.eq.s32.totalorder %s24, 0
      %s27 = sadd.s32 %s26, 1
      %s28 = scalar_select %p25, %s26, %s27
      %p31 = pneg %p25
      %p32 = scmp.eq.s32.totalorder %s16, 1
      %p33 = por %p31, %p32
      %p34 = scmp.ne.s32.totalorder %s26, %s29
      %p35 = scmp.eq.s32.totalorder %s16, 0
      %p36 = por %p34, %p35
      %p37 = scmp.ne.s32.totalorder %s26, %s29
      %p38 = scmp.eq.s32.totalorder %s21, 1
      %p39 = por %p37, %p38
      %p40 = scmp.ne.s32.totalorder %s29, %s30
      %p41 = scmp.eq.s32.totalorder %s21, 0
      %p42 = por %p40, %p41
      %p43 = scmp.ne.s32.totalorder %s29, %s30
      %p44 = scmp.eq.s32.totalorder %s22, 1
      %p45 = por %p43, %p44
      %p47 = scmp.ne.s32.totalorder %s30, %s46
      %p48 = scmp.eq.s32.totalorder %s22, 0
      %p49 = por %p47, %p48
      %s51 = sadd.s32 %s50, 1
      %p54 = scmp.eq.s32.totalorder %s16, 1
      %p55 = scmp.ne.s32.totalorder %s50, %s52
      %p56 = scmp.eq.s32.totalorder %s16, 0
      %p57 = por %p55, %p56
      %p58 = scmp.ne.s32.totalorder %s50, %s52
      %p59 = scmp.eq.s32.totalorder %s21, 1
      %p60 = por %p58, %p59
      %p61 = scmp.ne.s32.totalorder %s52, %s53
      %p62 = scmp.eq.s32.totalorder %s21, 0
      %p63 = por %p61, %p62
      %p64 = scmp.ne.s32.totalorder %s52, %s53
      %p65 = scmp.eq.s32.totalorder %s22, 1
      %p66 = por %p64, %p65
      %p68 = scmp.ne.s32.totalorder %s53, %s67
      %p69 = scmp.eq.s32.totalorder %s22, 0
      %p70 = por %p68, %p69
      %s72 = sadd.s32 %s71, 1
      %p75 = scmp.eq.s32.totalorder %s16, 1
      %p76 = scmp.ne.s32.totalorder %s71, %s73
      %p77 = scmp.eq.s32.totalorder %s16, 0
      %p78 = por %p76, %p77
      %p79 = scmp.ne.s32.totalorder %s71, %s73
      %p80 = scmp.eq.s32.totalorder %s21, 1
      %p81 = por %p79, %p80
      %p82 = scmp.ne.s32.totalorder %s73, %s74
      %p83 = scmp.eq.s32.totalorder %s21, 0
      %p84 = por %p82, %p83
      %p85 = scmp.ne.s32.totalorder %s73, %s74
      %p86 = scmp.eq.s32.totalorder %s22, 1
      %p87 = por %p85, %p86
      %p89 = scmp.ne.s32.totalorder %s74, %s88
      %p90 = scmp.eq.s32.totalorder %s22, 0
      %p91 = por %p89, %p90
      %s92 = ssub.s32 %s16, %s23
      %p93 = scmp.eq.s32.totalorder %s92, 0
      %s95 = sadd.s32 %s94, 1
      %s96 = scalar_select %p93, %s94, %s95
      %p99 = pneg %p93
      %p100 = scmp.eq.s32.totalorder %s16, 1
      %p101 = por %p99, %p100
      %p102 = scmp.ne.s32.totalorder %s94, %s97
      %p103 = scmp.eq.s32.totalorder %s16, 0
      %p104 = por %p102, %p103
      %p105 = scmp.ne.s32.totalorder %s94, %s97
      %p106 = scmp.eq.s32.totalorder %s21, 1
      %p107 = por %p105, %p106
      %p108 = scmp.ne.s32.totalorder %s97, %s98
      %p109 = scmp.eq.s32.totalorder %s21, 0
      %p110 = por %p108, %p109
      %p111 = scmp.ne.s32.totalorder %s97, %s98
      %p112 = scmp.eq.s32.totalorder %s22, 1
      %p113 = por %p111, %p112
      %p115 = scmp.ne.s32.totalorder %s98, %s114
      %p116 = scmp.eq.s32.totalorder %s22, 0
      %p117 = por %p115, %p116
      %p118 = scmp.le.s32.totalorder 1, %s16
      %p119 = scmp.lt.s32.totalorder %s16, 3
      %p120 = pnand %p118, %p119
      %p121 = pneg %p120
      // Predicated region
      $region9: #{tpu_custom_call.1} parent=5 // pred_check
        _
      $region10: #{tpu_custom_call.1} parent=5 // pred_check_branch
        %123 = sbr.rel (%p120) target = $region12
      $region11: #{tpu_custom_call.1} parent=5 // pred_region
        %s124 = ssub.s32 %s16, 1
        // Predicated region
        $region13: #{tpu_custom_call.1} parent=11 // pred_check
          %p125 = pneg %p63
        $region14: #{tpu_custom_call.1} parent=11 // pred_check_branch
          %127 = sbr.rel (%p125) target = $region16
        $region15: #{tpu_custom_call.1} parent=11 // pred_region
          %s129 = ssub.s32 256, 256
          %130 = vsyncadd [#allocation6], %s129
          %s131 = sshll.u32 [#allocation5], 4
          %s132 = int_to_ptr.vmem [resolvable:$true] %s131
          %137 = dma.hbm_to_vmem [thread:$0]  %s1, 256, %s132, [#allocation6], 64, 64, 4
        $region16: #{tpu_custom_call.1} parent=11 // pred_fallthru
          _
        // Predicated region
        $region17: #{tpu_custom_call.1} parent=11 // pred_check
          %p138 = pneg %p84
        $region18: #{tpu_custom_call.1} parent=11 // pred_check_branch
          %140 = sbr.rel (%p138) target = $region20
        $region19: #{tpu_custom_call.1} parent=11 // pred_region
          _
        $region20: #{tpu_custom_call.1} parent=11 // pred_fallthru
          _
      $region12: #{tpu_custom_call.1} parent=5 // pred_fallthru
        _
      %p141 = scmp.lt.s32.totalorder %s16, 2
      // Predicated region
      $region21: #{tpu_custom_call.1} parent=5 // pred_check
        %p142 = pneg %p141
      $region22: #{tpu_custom_call.1} parent=5 // pred_check_branch
        %144 = sbr.rel (%p142) target = $region24
      $region23: #{tpu_custom_call.1} parent=5 // pred_region
        // Predicated region
        $region25: #{tpu_custom_call.1} parent=23 // pred_check
          %p145 = pneg %p36
        $region26: #{tpu_custom_call.1} parent=23 // pred_check_branch
          %147 = sbr.rel (%p145) target = $region28
        $region27: #{tpu_custom_call.1} parent=23 // pred_region
          %s148 = sand.u32 %s26, 1
          %s149 = scalar_lea.sflag [#allocation3], %s148
          %s150 = sand.u32 %s26, 1
          %s151 = smul.addr %s150, 8
          %s152 = scalar_lea.vmem [#allocation2], %s151
          %s154 = ssub.s32 128, 128
          %155 = vsyncadd %s149, %s154
          %s156 = smul.addr %s16, 128
          %s157 = scalar_lea.hbm %s0, %s156
          %s159 = sshll.u32 %s152, 4
          %s160 = int_to_ptr.vmem [resolvable:$true] %s159
          %162 = dma.hbm_to_vmem [thread:$0]  %s157, 128, %s160, %s149
        $region28: #{tpu_custom_call.1} parent=23 // pred_fallthru
          _
      $region24: #{tpu_custom_call.1} parent=5 // pred_fallthru
        _
      %p163 = scmp.le.s32.totalorder 1, %s16
      %p164 = scmp.lt.s32.totalorder %s16, 3
      %p165 = pnand %p163, %p164
      %p166 = pneg %p165
      // Predicated region
      $region29: #{tpu_custom_call.1} parent=5 // pred_check
        _
      $region30: #{tpu_custom_call.1} parent=5 // pred_check_branch
        %168 = sbr.rel (%p165) target = $region32
      $region31: #{tpu_custom_call.1} parent=5 // pred_region
        %s169 = ssub.s32 %s16, 1
        %s170 = sand.u32 %s29, 1
        %s171 = scalar_lea.sflag [#allocation3], %s170
        %s172 = sand.u32 %s29, 1
        %s173 = smul.addr %s172, 8
        %s174 = scalar_lea.vmem [#allocation2], %s173
        // Predicated region
        $region33: #{tpu_custom_call.1} parent=31 // pred_check
          %p175 = pneg %p42
        $region34: #{tpu_custom_call.1} parent=31 // pred_check_branch
          %177 = sbr.rel (%p175) target = $region36
        $region35: #{tpu_custom_call.1} parent=31 // pred_region
          %178 = dma.done %s171, 128
        $region36: #{tpu_custom_call.1} parent=31 // pred_fallthru
          _
        // Predicated region
        $region37: #{tpu_custom_call.1} parent=31 // pred_check
          %p179 = pneg %p63
        $region38: #{tpu_custom_call.1} parent=31 // pred_check_branch
          %181 = sbr.rel (%p179) target = $region40
        $region39: #{tpu_custom_call.1} parent=31 // pred_region
          %182 = dma.done [#allocation6], 256
        $region40: #{tpu_custom_call.1} parent=31 // pred_fallthru
          _
        %s183 = sand.u32 %s29, 1
        %s184 = scalar_lea.sflag [#allocation3], %s183
        %s185 = sand.u32 %s29, 1
        %s186 = smul.addr %s185, 8
        %s187 = scalar_lea.vmem [#allocation2], %s186
        %p188 = pneg %p42
        %p189 = pneg %p39
        %p190 = pneg %p63
        %p191 = pneg %p60
        %p192 = pneg %p84
        %p193 = pneg %p81
        %p194 = pneg %p110
        %p195 = pneg %p107
        %s196 = sand.u32 %s97, 1
        %s197 = scalar_lea.sflag [#allocation4], %s196
        %s198 = sand.u32 %s97, 1
        %s199 = smul.addr %s198, 8
        %s200 = scalar_lea.vmem [#allocation7], %s199
        %v202 = vld [vmem:[%s174] sm:$0xff]
        %v203 = vpack.c.bf16 %v202, %v202
        %v204 = vld [vmem:[#allocation5] sm:$0xf]
        %v205 = vld [vmem:[#allocation5 + $0x4] sm:$0xf]
        %v206 = vld [vmem:[#allocation5 + $0x8] sm:$0xf]
        %v207 = vld [vmem:[#allocation5 + $0xc] sm:$0xf]
        %v208 = vld [vmem:[%s2] sm:$0x1]
        %v210 = vlaneseq
        %v211 = vshrl.u32 %v210, 7
        %v212 = vsub.s32 0, %v211
        %v213 = vrot.slane %v208, %v212
        %v219 = vunpack.c.l.b16 %v204
        %v220 = vunpack.c.l.b16 %v205
        %v221 = vunpack.c.l.b16 %v206
        %v222 = vunpack.c.l.b16 %v207
        %v223 = vpack.c.b16 %v220, %v219
        %v224 = vpack.c.b16 %v222, %v221
        %vm227 = vcmask 261120
        %v229 = vsel %vm227, %v203, 0
        %231 = vmatprep.subr.bf16.mxu0 0
        %232 = vmatpush1.bf16.msra.mxu0 %v223
        %233 = vmatprep.subr.bf16.mxu0 0
        %234 = vmatpush1.bf16.msra.mxu0 %v224
        %235 = vmatprep.subr.bf16.mxu0 0
        %236 = vmatpush1.bf16.msra.mxu0 0
        %237 = vmatprep.subr.bf16.mxu0 0
        %238 = vmatpush1.bf16.msra.mxu0 0
        %239 = vmatprep.subr.bf16.mxu0 0
        %240 = vmatpush1.bf16.msra.mxu0 0
        %241 = vmatprep.subr.bf16.mxu0 0
        %242 = vmatpush1.bf16.msra.mxu0 0
        %243 = vmatprep.subr.bf16.mxu0 0
        %244 = vmatpush1.bf16.msra.mxu0 0
        %245 = vmatprep.subr.bf16.mxu0 0
        %246 = vmatpush1.bf16.msra.mxu0 0
        %247 = vmatprep.subr.bf16.mxu0 0
        %248 = vmatpush1.bf16.msra.mxu0 0
        %249 = vmatprep.subr.bf16.mxu0 0
        %250 = vmatpush1.bf16.msra.mxu0 0
        %251 = vmatprep.subr.bf16.mxu0 0
        %252 = vmatpush1.bf16.msra.mxu0 0
        %253 = vmatprep.subr.bf16.mxu0 0
        %254 = vmatpush1.bf16.msra.mxu0 0
        %255 = vmatprep.subr.bf16.mxu0 0
        %256 = vmatpush1.bf16.msra.mxu0 0
        %257 = vmatprep.subr.bf16.mxu0 0
        %258 = vmatpush1.bf16.msra.mxu0 0
        %259 = vmatprep.subr.bf16.mxu0 0
        %260 = vmatpush1.bf16.msra.mxu0 0
        %261 = vmatprep.subr.bf16.mxu0 0
        %262 = vmatpush1.bf16.msra.mxu0 0
        %263 = vmatprep.mubr.bf16.mxu0 0
        %264 = vmatmul.mubr.bf16.gmra.mrb[0].mxu0 %v229
        %v265 = vpop.f32.mrb[0].mxu0
        %v266 = vadd.f32 %v213, %v265
        %v267 = vpop.f32.mrb[0].mxu0
        %v268 = vpop.f32.mrb[0].mxu0
        %v269 = vpop.f32.mrb[0].mxu0
        %270 = vdwg.mxu0
        %v271 = vmul.f32 %v266, %v266
        %v272 = vmul.f32 %v266, %v271
        %v273 = vmul.f32 %v272, 0.044715
        %v274 = vadd.f32 %v266, %v273
        %v275 = vmul.f32 %v274, 0.7978846
        %v276 = vtanh.pop %v275
        %v277 = vadd.f32 %v276, 1.0
        %v278 = vmul.f32 %v277, 0.5
        %v279 = vmul.f32 %v266, %v278
        %280 = vst [vmem:[%s200] sm:$0xff] %v279
        %s281 = sand.u32 %s97, 1
        %s282 = scalar_lea.sflag [#allocation4], %s281
        %s283 = sand.u32 %s97, 1
        %s284 = smul.addr %s283, 8
        %s285 = scalar_lea.vmem [#allocation7], %s284
        // Predicated region
        $region41: #{tpu_custom_call.1} parent=31 // pred_check
          %p286 = pneg %p107
        $region42: #{tpu_custom_call.1} parent=31 // pred_check_branch
          %288 = sbr.rel (%p286) target = $region44
        $region43: #{tpu_custom_call.1} parent=31 // pred_region
          %s290 = ssub.s32 128, 128
          %291 = vsyncadd %s282, %s290
          %s292 = smul.addr %s21, 128
          %s293 = scalar_lea.hbm %s3, %s292
          %s295 = sshll.u32 %s285, 4
          %s296 = int_to_ptr.vmem [resolvable:$true] %s295
          %298 = dma.vmem_to_hbm [thread:$0]  %s296, 128, %s293, %s282
        $region44: #{tpu_custom_call.1} parent=31 // pred_fallthru
          _
      $region32: #{tpu_custom_call.1} parent=5 // pred_fallthru
        _
      %p299 = scmp.le.s32.totalorder 2, %s16
      // Predicated region
      $region45: #{tpu_custom_call.1} parent=5 // pred_check
        %p300 = pneg %p299
      $region46: #{tpu_custom_call.1} parent=5 // pred_check_branch
        %302 = sbr.rel (%p300) target = $region48
      $region47: #{tpu_custom_call.1} parent=5 // pred_region
        %s303 = ssub.s32 %s16, 2
        // Predicated region
        $region49: #{tpu_custom_call.1} parent=47 // pred_check
          %p304 = pneg %p113
        $region50: #{tpu_custom_call.1} parent=47 // pred_check_branch
          %306 = sbr.rel (%p304) target = $region52
        $region51: #{tpu_custom_call.1} parent=47 // pred_region
          %s307 = sand.u32 %s98, 1
          %s308 = scalar_lea.sflag [#allocation4], %s307
          %s309 = sand.u32 %s98, 1
          %s310 = smul.addr %s309, 8
          %s311 = scalar_lea.vmem [#allocation7], %s310
          %312 = dma.done %s308, 128
        $region52: #{tpu_custom_call.1} parent=47 // pred_fallthru
          _
      $region48: #{tpu_custom_call.1} parent=5 // pred_fallthru
        _
    $region6: #{tpu_custom_call.1} parent=1 // loop_footer
      %s20 = sadd.s32 1, %s16
    $region7: #{tpu_custom_call.1} parent=1 // loop_footer_branch
      %15 = sbr.rel target = $region3
    $region8: #{tpu_custom_call.1} parent=1 // loop_exit
      _
    %313 = vsyncpa [#allocation3], 1
    %s314 = scalar_lea.sflag [#allocation3], 1
    %315 = vsyncpa %s314, 1
    %316 = vsyncpa [#allocation6], 1
    %317 = vsyncpa [#allocation4], 1
    %s318 = scalar_lea.sflag [#allocation4], 1
    %319 = vsyncpa %s318, 1

</llo_original>
